<compile_context>
chip_gen: v5e
topology: v5e:2x2
jax: 0.10.0
libtpu: 0.0.40
codegen_flags: <defaults>
</compile_context>

<pallas_src>
import numpy as np
import jax
import jax.numpy as jnp
from jax.experimental import pallas as pl
from jax.experimental.pallas import tpu as pltpu


def length_regulator_kernel(len_ref, x_ref, cs_ref, dur_ref, out_ref):
    # len_ref: (B,) int32 in SMEM (scalar prefetch) — expanded length per batch
    # x_ref:   (1, S, D)   phoneme hidden states for this batch element
    # cs_ref:  (1, 1, S)   int32 exclusive cumulative sum of durations
    # dur_ref: (1, 1, S)   int32 (clamped >= 0) durations
    # out_ref: (1, tT, D)  output frames [t_base, t_base + tT)
    S = x_ref.shape[1]
    tT = out_ref.shape[1]

    b = pl.program_id(0)
    t_base = pl.program_id(1) * tT
    total = len_ref[b]

    # Tile entirely past the expanded length: pure zero padding, skip all compute.
    @pl.when(t_base >= total)
    def _pad_only():
        out_ref[...] = jnp.zeros_like(out_ref)

    @pl.when(t_base < total)
    def _expand():
        cs_excl = cs_ref[0]                    # (1, S) int32
        dur = dur_ref[0]                       # (1, S) int32

        t_idx = t_base + jax.lax.broadcasted_iota(jnp.int32, (tT, S), 0)  # (tT, S)

        # Frame t belongs to phoneme i iff cs_excl[i] <= t < cs_excl[i] + dur[i].
        # Single unsigned range test: (t - cs_excl) wraps to a huge uint32 when
        # t < cs_excl, so one `<u dur` compare covers both bounds exactly.
        diff = t_idx - cs_excl                                            # (tT, S)
        a = (diff.astype(jnp.uint32) < dur.astype(jnp.uint32)).astype(x_ref.dtype)

        # Each row of `a` has at most one 1, so the matmul is an exact row gather
        # (exact even in bf16). Rows past sum(duration) are all-zero -> zero pad.
        out_ref[0] = jnp.dot(a, x_ref[0],
                             preferred_element_type=jnp.float32).astype(out_ref.dtype)


def length_regulator(x, duration, max_len, *, tile_t=256):
    """x: [B, S, D] float, duration: [B, S] int, max_len: static int.

    Returns (output [B, max_len, D], mel_len [B] int32).
    """
    B, S, D = x.shape
    T = int(max_len)

    # Hoisted scalar work (trivial fused XLA ops): clamp, cumsum, mel_len.
    dur = jnp.maximum(duration.astype(jnp.int32), 0)          # match max(int(d), 0)
    mel_len = jnp.sum(dur, axis=-1).astype(jnp.int32)         # (B,)
    cs_excl = (jnp.cumsum(dur, axis=-1, dtype=jnp.int32) - dur).reshape(B, 1, S)
    dur3 = dur.reshape(B, 1, S)

    # T tiling: full T if small, otherwise tile_t-row blocks (multiple of 8).
    tT = T if T <= tile_t else tile_t
    grid_t = pl.cdiv(T, tT)
    T_pad = grid_t * tT

    itemsize = jnp.dtype(x.dtype).itemsize
    vmem_need = (2 * tT * D * itemsize          # output double-buffer
                 + 2 * S * D * itemsize         # x double-buffer
                 + 4 * S * 4                    # cs + dur double-buffer
                 + tT * S * 4 + tT * D * 4)     # assignment slab + f32 acc temp
    vmem_limit = int(min(max(2 * vmem_need, 8 << 20), 32 << 20))

    cost = pl.CostEstimate(
        flops=2 * B * T_pad * S * D,
        transcendentals=0,
        bytes_accessed=itemsize * (B * S * D + B * T_pad * D) + 8 * B * S + 4 * B)

    out = pl.pallas_call(
        length_regulator_kernel,
        out_shape=jax.ShapeDtypeStruct((B, T_pad, D), x.dtype),
        grid_spec=pltpu.PrefetchScalarGridSpec(
            num_scalar_prefetch=1,             # mel_len -> SMEM
            grid=(B, grid_t),
            in_specs=[pl.BlockSpec((1, S, D), lambda b, t, ln: (b, 0, 0)),
                      pl.BlockSpec((1, 1, S), lambda b, t, ln: (b, 0, 0)),
                      pl.BlockSpec((1, 1, S), lambda b, t, ln: (b, 0, 0))],
            out_specs=pl.BlockSpec((1, tT, D), lambda b, t, ln: (b, t, 0))),
        compiler_params=pltpu.CompilerParams(
            dimension_semantics=("parallel", "parallel"),
            vmem_limit_bytes=vmem_limit),
        cost_estimate=cost,
    )(mel_len, x, cs_excl, dur3)

    if T_pad != T:
        out = out[:, :T, :]
    return out, mel_len


def _reference_lr(x, dur, max_len):
    # Pure-numpy reimplementation of the PyTorch LengthRegulator.forward
    x = np.asarray(x)
    dur = np.asarray(dur)
    B, S, D = x.shape
    out = np.zeros((B, max_len, D), dtype=x.dtype)
    lens = []
    for b in range(B):
        rows = []
        for i in range(S):
            n = max(int(dur[b, i]), 0)
            rows.extend([x[b, i]] * n)
        L = len(rows)
        lens.append(L)
        if L > 0:
            out[b, :min(L, max_len)] = np.stack(rows, axis=0)[:max_len]
    return out, np.array(lens, dtype=np.int32)


if __name__ == "__main__":
    # LengthRegulator has no learnable parameters (its __init__ is empty).
    B, S, D = 2, 8, 128
    max_len = 32  # static output length (PyTorch max_len argument)

    key = jax.random.PRNGKey(0)
    kx, kd = jax.random.split(key)
    x = jax.random.normal(kx, (B, S, D), dtype=jnp.float32)
    # durations in [0, 4]; worst-case sum per batch = 32 <= max_len
    duration = jax.random.randint(kd, (B, S), 0, 5, dtype=jnp.int32)

    # tile_t=16 exercises the (B, T-tile) grid and the padding-skip path
    # even at this small demo shape.
    out, mel_len = length_regulator(x, duration, max_len, tile_t=16)
    out = jax.block_until_ready(out)
    mel_len = jax.block_until_ready(mel_len)

    ref_out, ref_len = _reference_lr(np.asarray(x), np.asarray(duration), max_len)
    assert np.allclose(np.asarray(out), ref_out, atol=1e-5, rtol=1e-5)
    assert np.array_equal(np.asarray(mel_len), ref_len)

    print("KERNEL_OK")
</pallas_src>

<mosaic_0001>
module attributes {stable_mosaic.version = 11 : i64} {
  func.func @length_regulator_kernel(%arg0: i32, %arg1: i32, %arg2: memref<2xi32, #tpu.memory_space<smem>>, %arg3: memref<1x8x128xf32, #tpu.memory_space<vmem>>, %arg4: memref<1x1x8xi32, #tpu.memory_space<vmem>>, %arg5: memref<1x1x8xi32, #tpu.memory_space<vmem>>, %arg6: memref<1x16x128xf32, #tpu.memory_space<vmem>>) attributes {dimension_semantics = [#tpu.dimension_semantics<parallel>, #tpu.dimension_semantics<parallel>], iteration_bounds = array<i64: 2, 2>, scalar_prefetch = 1 : i64, scratch_operands = 0 : i64, tpu.core_type = #tpu.core_type<tc>, window_params = [{transform_indices = @transform_0, window_bounds = array<i64: 1, 8, 128>}, {transform_indices = @transform_1, window_bounds = array<i64: 1, 1, 8>}, {transform_indices = @transform_2, window_bounds = array<i64: 1, 1, 8>}, {transform_indices = @transform_3, window_bounds = array<i64: 1, 16, 128>}]} {
    %c16_i32 = arith.constant 16 : i32
    %0 = arith.muli %arg1, %c16_i32 : i32
    %1 = arith.index_cast %arg0 : i32 to index
    %2 = memref.load %arg2[%1] : memref<2xi32, #tpu.memory_space<smem>>
    %3 = arith.cmpi sge, %0, %2 : i32
    %4 = arith.extui %3 : i1 to i32
    %c0_i32 = arith.constant 0 : i32
    %5 = arith.cmpi ne, %4, %c0_i32 : i32
    scf.if %5 {
      %cst = arith.constant 0.000000e+00 : f32
      %9 = vector.broadcast %cst : f32 to vector<1x16x128xf32>
      %c0 = arith.constant 0 : index
      %c0_1 = arith.constant 0 : index
      %c0_2 = arith.constant 0 : index
      %10 = vector.load %arg6[%c0, %c0_1, %c0_2] : memref<1x16x128xf32, #tpu.memory_space<vmem>>, vector<1x16x128xf32>
      tpu.vector_store %arg6[%c0, %c0_1, %c0_2], %9 {strides = array<i32>} : memref<1x16x128xf32, #tpu.memory_space<vmem>>, vector<1x16x128xf32>,
    } else {
    }
    %6 = arith.cmpi slt, %0, %2 : i32
    %7 = arith.extui %6 : i1 to i32
    %c0_i32_0 = arith.constant 0 : i32
    %8 = arith.cmpi ne, %7, %c0_i32_0 : i32
    scf.if %8 {
      %c0 = arith.constant 0 : index
      %c0_1 = arith.constant 0 : index
      %c0_2 = arith.constant 0 : index
      %9 = vector.load %arg4[%c0, %c0_1, %c0_2] : memref<1x1x8xi32, #tpu.memory_space<vmem>>, vector<1x1x8xi32>
      %10 = vector.shape_cast %9 : vector<1x1x8xi32> to vector<1x8xi32>
      %c0_3 = arith.constant 0 : index
      %c0_4 = arith.constant 0 : index
      %c0_5 = arith.constant 0 : index
      %11 = vector.load %arg5[%c0_3, %c0_4, %c0_5] : memref<1x1x8xi32, #tpu.memory_space<vmem>>, vector<1x1x8xi32>
      %12 = vector.shape_cast %11 : vector<1x1x8xi32> to vector<1x8xi32>
      %13 = tpu.iota {dimensions = array<i32: 0>} : vector<16x8xi32>
      %14 = vector.broadcast %0 : i32 to vector<16x8xi32>
      %15 = arith.addi %14, %13 : vector<16x8xi32>
      %16 = vector.broadcast %10 : vector<1x8xi32> to vector<16x8xi32>
      %17 = arith.subi %15, %16 : vector<16x8xi32>
      %18 = vector.broadcast %12 : vector<1x8xi32> to vector<16x8xi32>
      %19 = arith.cmpi ult, %17, %18 : vector<16x8xi32>
      %20 = arith.extui %19 : vector<16x8xi1> to vector<16x8xi32>
      %21 = arith.sitofp %20 : vector<16x8xi32> to vector<16x8xf32>
      %c0_6 = arith.constant 0 : index
      %c0_7 = arith.constant 0 : index
      %c0_8 = arith.constant 0 : index
      %22 = vector.load %arg3[%c0_6, %c0_7, %c0_8] : memref<1x8x128xf32, #tpu.memory_space<vmem>>, vector<1x8x128xf32>
      %23 = vector.shape_cast %22 : vector<1x8x128xf32> to vector<8x128xf32>
      %cst = arith.constant dense<0.000000e+00> : vector<16x128xf32>
      %24 = tpu.matmul %21, %23, %cst {dimension_numbers = #tpu.dot_dimension_numbers<[1], [0], [0], [1], [0, 0, 1, 1], [], []>} : vector<16x8xf32>, vector<8x128xf32>, vector<16x128xf32> -> vector<16x128xf32>
      %c0_9 = arith.constant 0 : index
      %c0_10 = arith.constant 0 : index
      %c0_11 = arith.constant 0 : index
      %25 = vector.load %arg6[%c0_9, %c0_10, %c0_11] : memref<1x16x128xf32, #tpu.memory_space<vmem>>, vector<1x16x128xf32>
      %26 = vector.shape_cast %25 : vector<1x16x128xf32> to vector<16x128xf32>
      %27 = vector.shape_cast %24 : vector<16x128xf32> to vector<1x16x128xf32>
      tpu.vector_store %arg6[%c0_9, %c0_10, %c0_11], %27 {strides = array<i32>} : memref<1x16x128xf32, #tpu.memory_space<vmem>>, vector<1x16x128xf32>,
    } else {
    }
    return
  }
  func.func @transform_0(%arg0: i32, %arg1: i32, %arg2: memref<2xi32, #tpu.memory_space<smem>>) -> (i32, i32, i32) {
    %c0_i32 = arith.constant 0 : i32
    %c0_i32_0 = arith.constant 0 : i32
    %c0_i32_1 = arith.constant 0 : i32
    return %arg0, %c0_i32, %c0_i32_0 : i32, i32, i32
  }
  func.func @transform_1(%arg0: i32, %arg1: i32, %arg2: memref<2xi32, #tpu.memory_space<smem>>) -> (i32, i32, i32) {
    %c0_i32 = arith.constant 0 : i32
    %c0_i32_0 = arith.constant 0 : i32
    %c0_i32_1 = arith.constant 0 : i32
    return %arg0, %c0_i32, %c0_i32_0 : i32, i32, i32
  }
  func.func @transform_2(%arg0: i32, %arg1: i32, %arg2: memref<2xi32, #tpu.memory_space<smem>>) -> (i32, i32, i32) {
    %c0_i32 = arith.constant 0 : i32
    %c0_i32_0 = arith.constant 0 : i32
    %c0_i32_1 = arith.constant 0 : i32
    return %arg0, %c0_i32, %c0_i32_0 : i32, i32, i32
  }
  func.func @transform_3(%arg0: i32, %arg1: i32, %arg2: memref<2xi32, #tpu.memory_space<smem>>) -> (i32, i32, i32) {
    %c0_i32 = arith.constant 0 : i32
    %c0_i32_0 = arith.constant 0 : i32
    return %arg0, %arg1, %c0_i32 : i32, i32, i32
  }
}

</mosaic_0001>

<llo_original>
// kernel: tpu_custom_call.1
$region0: #{tpu_custom_call.1}
  #allocation0 [shape = 'u32[]', space=smem, size = 0x4, offset = 0x4, fixed_abs, tag = 'smem constant byte address 0x4 - core index']
  #allocation1 [shape = 'u32[72,128]{1,0:T(1,128)}', space=vmem, size = 0x9000, scoped, tag = 'internal scratch']
  #allocation2 [shape = 's32[1]{0}', space=sflag, size = 0x4, scoped, tag = 'scoped memory for tpu_custom_call.1']
  #allocation3 [shape = 'u8[512]{0}', space=smem, size = 0x200, scoped, tag = 'prefetched SMEM operand 0']
  %s0 = inlined_call_operand.hbm [shape: s32[2], index: 0, kind: input, shape index: {}]
  %s1 = inlined_call_operand.hbm [shape: f32[2,8,128], index: 1, kind: input, shape index: {}]
  %s2 = inlined_call_operand.hbm [shape: s32[2,1,8], index: 2, kind: input, shape index: {}]
  %s3 = inlined_call_operand.vmem [shape: s32[2,1,8], index: 3, kind: input, shape index: {}]
  %s4 = inlined_call_operand.hbm [shape: f32[2,32,128], index: 4, kind: output, shape index: {}]
  %s5 = sld [smem:[#allocation0]]
  $region61: #{tpu_custom_call.1} parent=0
    _
  %s7 = ssub.s32 1, %s5
  %s8 = scalar_select 0, %s7, %s5
  %s10 = sshll.u32 %s0, 4
  %s11 = int_to_ptr.hbm [resolvable:$true] %s10
  %13 = dma.hbm_to_smem %s11, 16, [#allocation3], [#allocation2]
  %15 = dma.done [#allocation2], 16
  %16 = sfence
  $region1: #{tpu_custom_call.1} parent=0
    #allocation4 [shape = 'u8[8192]{0}', space=vmem, size = 0x2000, scoped, tag = 'input window, operand 1']
    #allocation5 [shape = 's32[2]{0}', space=sflag, size = 0x8, scoped, tag = 'scoped memory for tpu_custom_call.1']
    #allocation6 [shape = 's32[2]{0}', space=sflag, size = 0x8, scoped, tag = 'scoped memory for tpu_custom_call.1']
    #allocation7 [shape = 'u8[1024]{0}', space=vmem, size = 0x400, scoped, tag = 'input window, operand 2']
    #allocation8 [shape = 's32[2]{0}', space=sflag, size = 0x8, scoped, tag = 'scoped memory for tpu_custom_call.1']
    #allocation9 [shape = 'u8[16384]{0}', space=vmem, size = 0x4000, scoped, tag = 'output window, operand 0']
    %17 = vsyncpa [#allocation5], 0
    %s18 = scalar_lea.sflag [#allocation5], 1
    %19 = vsyncpa %s18, 0
    %20 = vsyncpa [#allocation8], 0
    %s21 = scalar_lea.sflag [#allocation8], 1
    %22 = vsyncpa %s21, 0
    %23 = vsyncpa [#allocation6], 0
    %s24 = scalar_lea.sflag [#allocation6], 1
    %25 = vsyncpa %s24, 0
    loop: start=0, step=1, limit=6
    $region2: #{tpu_custom_call.1} parent=1 // loop_pre_header
      _
    $region3: #{tpu_custom_call.1} parent=1 // loop_header
      %s27 = sphi 0, %s31
      %p28 = scmp.ge.s32.totalorder %s27, 6
      %s34 = sphi 0, %s46
      %s35 = sphi 0, %s42
      %s36 = sphi 0, %s34
      %s37 = sphi 0, %s35
      %s38 = sphi 0, %s36
      %s39 = sphi 0, %s37
      %s49 = sphi 0, %s51
      %s52 = sphi 0, %s49
      %s53 = sphi 0, %s52
      %s69 = sphi 0, %s53
      %s75 = sphi 0, %s77
      %s78 = sphi 0, %s75
      %s79 = sphi 0, %s78
      %s95 = sphi 0, %s79
      %s101 = sphi 0, %s103
      %s104 = sphi 0, %s101
      %s105 = sphi 0, %s104
      %s121 = sphi 0, %s105
      %s129 = sphi 0, %s131
      %s132 = sphi 0, %s129
      %s133 = sphi 0, %s132
      %s149 = sphi 0, %s133
    $region4: #{tpu_custom_call.1} parent=1 // loop_header_branch
      %30 = sbr.rel (%p28) target = $region8
    $region5: #{tpu_custom_call.1} parent=1 // loop_body
      %s32 = ssub.s32 %s27, 1
      %s33 = ssub.s32 %s27, 2
      %s40 = sadd.s32 1, %s35
      %p41 = scmp.ge.s32.totalorder %s40, 2
      %s42 = scalar_select %p41, 0, %s40
      %s43 = sadd.s32 1, %s34
      %s44 = scalar_select %p41, %s43, %s34
      %p45 = scmp.ge.s32.totalorder %s44, 2
      %s46 = scalar_select %p45, 0, %s44
      %s47 = ssub.s32 %s34, %s46
      %p48 = scmp.eq.s32.totalorder %s47, 0
      %s50 = sadd.s32 %s49, 1
      %s51 = scalar_select %p48, %s49, %s50
      %p54 = pneg %p48
      %p55 = scmp.eq.s32.totalorder %s27, 3
      %p56 = por %p54, %p55
      %p57 = scmp.ne.s32.totalorder %s49, %s52
      %p58 = scmp.eq.s32.totalorder %s27, 0
      %p59 = por %p57, %p58
      %p60 = scmp.ne.s32.totalorder %s49, %s52
      %p61 = scmp.eq.s32.totalorder %s32, 3
      %p62 = por %p60, %p61
      %p63 = scmp.ne.s32.totalorder %s52, %s53
      %p64 = scmp.eq.s32.totalorder %s32, 0
      %p65 = por %p63, %p64
      %p66 = scmp.ne.s32.totalorder %s52, %s53
      %p67 = scmp.eq.s32.totalorder %s33, 3
      %p68 = por %p66, %p67
      %p70 = scmp.ne.s32.totalorder %s53, %s69
      %p71 = scmp.eq.s32.totalorder %s33, 0
      %p72 = por %p70, %p71
      %s73 = ssub.s32 %s34, %s46
      %p74 = scmp.eq.s32.totalorder %s73, 0
      %s76 = sadd.s32 %s75, 1
      %s77 = scalar_select %p74, %s75, %s76
      %p80 = pneg %p74
      %p81 = scmp.eq.s32.totalorder %s27, 3
      %p82 = por %p80, %p81
      %p83 = scmp.ne.s32.totalorder %s75, %s78
      %p84 = scmp.eq.s32.totalorder %s27, 0
      %p85 = por %p83, %p84
      %p86 = scmp.ne.s32.totalorder %s75, %s78
      %p87 = scmp.eq.s32.totalorder %s32, 3
      %p88 = por %p86, %p87
      %p89 = scmp.ne.s32.totalorder %s78, %s79
      %p90 = scmp.eq.s32.totalorder %s32, 0
      %p91 = por %p89, %p90
      %p92 = scmp.ne.s32.totalorder %s78, %s79
      %p93 = scmp.eq.s32.totalorder %s33, 3
      %p94 = por %p92, %p93
      %p96 = scmp.ne.s32.totalorder %s79, %s95
      %p97 = scmp.eq.s32.totalorder %s33, 0
      %p98 = por %p96, %p97
      %s99 = ssub.s32 %s34, %s46
      %p100 = scmp.eq.s32.totalorder %s99, 0
      %s102 = sadd.s32 %s101, 1
      %s103 = scalar_select %p100, %s101, %s102
      %p106 = pneg %p100
      %p107 = scmp.eq.s32.totalorder %s27, 3
      %p108 = por %p106, %p107
      %p109 = scmp.ne.s32.totalorder %s101, %s104
      %p110 = scmp.eq.s32.totalorder %s27, 0
      %p111 = por %p109, %p110
      %p112 = scmp.ne.s32.totalorder %s101, %s104
      %p113 = scmp.eq.s32.totalorder %s32, 3
      %p114 = por %p112, %p113
      %p115 = scmp.ne.s32.totalorder %s104, %s105
      %p116 = scmp.eq.s32.totalorder %s32, 0
      %p117 = por %p115, %p116
      %p118 = scmp.ne.s32.totalorder %s104, %s105
      %p119 = scmp.eq.s32.totalorder %s33, 3
      %p120 = por %p118, %p119
      %p122 = scmp.ne.s32.totalorder %s105, %s121
      %p123 = scmp.eq.s32.totalorder %s33, 0
      %p124 = por %p122, %p123
      %s125 = ssub.s32 %s34, %s46
      %s126 = ssub.s32 %s35, %s42
      %s127 = sor.u32 %s125, %s126
      %p128 = scmp.eq.s32.totalorder %s127, 0
      %s130 = sadd.s32 %s129, 1
      %s131 = scalar_select %p128, %s129, %s130
      %p134 = pneg %p128
      %p135 = scmp.eq.s32.totalorder %s27, 3
      %p136 = por %p134, %p135
      %p137 = scmp.ne.s32.totalorder %s129, %s132
      %p138 = scmp.eq.s32.totalorder %s27, 0
      %p139 = por %p137, %p138
      %p140 = scmp.ne.s32.totalorder %s129, %s132
      %p141 = scmp.eq.s32.totalorder %s32, 3
      %p142 = por %p140, %p141
      %p143 = scmp.ne.s32.totalorder %s132, %s133
      %p144 = scmp.eq.s32.totalorder %s32, 0
      %p145 = por %p143, %p144
      %p146 = scmp.ne.s32.totalorder %s132, %s133
      %p147 = scmp.eq.s32.totalorder %s33, 3
      %p148 = por %p146, %p147
      %p150 = scmp.ne.s32.totalorder %s133, %s149
      %p151 = scmp.eq.s32.totalorder %s33, 0
      %p152 = por %p150, %p151
      %p153 = scmp.le.s32.totalorder 1, %s27
      %p154 = scmp.lt.s32.totalorder %s27, 5
      %p155 = pnand %p153, %p154
      %p156 = pneg %p155
      // Predicated region
      $region9: #{tpu_custom_call.1} parent=5 // pred_check
        _
      $region10: #{tpu_custom_call.1} parent=5 // pred_check_branch
        %158 = sbr.rel (%p155) target = $region12
      $region11: #{tpu_custom_call.1} parent=5 // pred_region
        %s159 = ssub.s32 %s27, 1
      $region12: #{tpu_custom_call.1} parent=5 // pred_fallthru
        _
      %p160 = scmp.lt.s32.totalorder %s27, 4
      // Predicated region
      $region13: #{tpu_custom_call.1} parent=5 // pred_check
        %p161 = pneg %p160
      $region14: #{tpu_custom_call.1} parent=5 // pred_check_branch
        %163 = sbr.rel (%p161) target = $region16
      $region15: #{tpu_custom_call.1} parent=5 // pred_region
        // Predicated region
        $region17: #{tpu_custom_call.1} parent=15 // pred_check
          %p164 = pneg %p59
        $region18: #{tpu_custom_call.1} parent=15 // pred_check_branch
          %166 = sbr.rel (%p164) target = $region20
        $region19: #{tpu_custom_call.1} parent=15 // pred_region
          %s167 = sand.u32 %s49, 1
          %s168 = scalar_lea.sflag [#allocation5], %s167
          %s169 = sand.u32 %s49, 1
          %s170 = smul.addr %s169, 8
          %s171 = scalar_lea.vmem [#allocation4], %s170
          %173 = vsyncadd %s168, 0
          %s174 = smul.addr %s34, 8
          %s175 = scalar_lea.hbm %s1, %s174
          %s177 = sshll.u32 %s175, 4
          %s178 = int_to_ptr.hbm [resolvable:$true] %s177
          %s179 = sshll.u32 %s171, 4
          %s180 = int_to_ptr.vmem [resolvable:$true] %s179
          %182 = dma.hbm_to_vmem [thread:$0]  %s178, 128, %s180, %s168
        $region20: #{tpu_custom_call.1} parent=15 // pred_fallthru
          _
        // Predicated region
        $region21: #{tpu_custom_call.1} parent=15 // pred_check
          %p183 = pneg %p85
        $region22: #{tpu_custom_call.1} parent=15 // pred_check_branch
          %185 = sbr.rel (%p183) target = $region24
        $region23: #{tpu_custom_call.1} parent=15 // pred_region
          %s186 = sand.u32 %s75, 1
          %s187 = scalar_lea.sflag [#allocation8], %s186
          %s188 = sand.u32 %s75, 1
          %s189 = scalar_lea.vmem [#allocation7], %s188
          %191 = vsyncadd %s187, 0
          %s192 = scalar_lea.hbm %s2, %s34
          %s194 = sshll.u32 %s192, 4
          %s195 = int_to_ptr.hbm [resolvable:$true] %s194
          %s196 = sshll.u32 %s189, 4
          %s197 = int_to_ptr.vmem [resolvable:$true] %s196
          %199 = dma.hbm_to_vmem [thread:$0]  %s195, 16, %s197, %s187
        $region24: #{tpu_custom_call.1} parent=15 // pred_fallthru
          _
        // Predicated region
        $region25: #{tpu_custom_call.1} parent=15 // pred_check
          %p200 = pneg %p111
        $region26: #{tpu_custom_call.1} parent=15 // pred_check_branch
          %202 = sbr.rel (%p200) target = $region28
        $region27: #{tpu_custom_call.1} parent=15 // pred_region
          %p203 = scmp.lt.s32.totalorder %s34, 1
          %s204 = scalar_select %p203, %s34, 1
          %s205 = scalar_lea.vmem %s3, %s204
        $region28: #{tpu_custom_call.1} parent=15 // pred_fallthru
          _
      $region16: #{tpu_custom_call.1} parent=5 // pred_fallthru
        _
      %p206 = scmp.le.s32.totalorder 1, %s27
      %p207 = scmp.lt.s32.totalorder %s27, 5
      %p208 = pnand %p206, %p207
      %p209 = pneg %p208
      // Predicated region
      $region29: #{tpu_custom_call.1} parent=5 // pred_check
        _
      $region30: #{tpu_custom_call.1} parent=5 // pred_check_branch
        %211 = sbr.rel (%p208) target = $region32
      $region31: #{tpu_custom_call.1} parent=5 // pred_region
        %s212 = ssub.s32 %s27, 1
        %s213 = sand.u32 %s52, 1
        %s214 = scalar_lea.sflag [#allocation5], %s213
        %s215 = sand.u32 %s52, 1
        %s216 = smul.addr %s215, 8
        %s217 = scalar_lea.vmem [#allocation4], %s216
        // Predicated region
        $region33: #{tpu_custom_call.1} parent=31 // pred_check
          %p218 = pneg %p65
        $region34: #{tpu_custom_call.1} parent=31 // pred_check_branch
          %220 = sbr.rel (%p218) target = $region36
        $region35: #{tpu_custom_call.1} parent=31 // pred_region
          %222 = dma.done %s214, 128
        $region36: #{tpu_custom_call.1} parent=31 // pred_fallthru
          _
        %s223 = sand.u32 %s78, 1
        %s224 = scalar_lea.sflag [#allocation8], %s223
        %s225 = sand.u32 %s78, 1
        %s226 = scalar_lea.vmem [#allocation7], %s225
        // Predicated region
        $region37: #{tpu_custom_call.1} parent=31 // pred_check
          %p227 = pneg %p91
        $region38: #{tpu_custom_call.1} parent=31 // pred_check_branch
          %229 = sbr.rel (%p227) target = $region40
        $region39: #{tpu_custom_call.1} parent=31 // pred_region
          %231 = dma.done %s224, 16
        $region40: #{tpu_custom_call.1} parent=31 // pred_fallthru
          _
        %s232 = sand.u32 %s52, 1
        %s233 = scalar_lea.sflag [#allocation5], %s232
        %s234 = sand.u32 %s52, 1
        %s235 = smul.addr %s234, 8
        %s236 = scalar_lea.vmem [#allocation4], %s235
        %p237 = pneg %p65
        %p238 = pneg %p62
        %s239 = sand.u32 %s78, 1
        %s240 = scalar_lea.sflag [#allocation8], %s239
        %s241 = sand.u32 %s78, 1
        %s242 = scalar_lea.vmem [#allocation7], %s241
        %p243 = pneg %p91
        %p244 = pneg %p88
        %p245 = scmp.lt.s32.totalorder %s36, 1
        %s246 = scalar_select %p245, %s36, 1
        %s247 = scalar_lea.vmem %s3, %s246
        %p248 = pneg %p117
        %p249 = pneg %p114
        %p250 = pneg %p145
        %p251 = pneg %p142
        %s252 = sand.u32 %s132, 1
        %s253 = scalar_lea.sflag [#allocation6], %s252
        %s254 = sand.u32 %s132, 1
        %s255 = smul.addr %s254, 16
        %s256 = scalar_lea.vmem [#allocation9], %s255
        %p257 = scmp.lt.s32.totalorder %s36, 1
        %s258 = scalar_select %p257, %s36, 1
        %s259 = scalar_lea.vmem %s3, %s258
        %s260 = smul.u32 2, %s37
        %s261 = smul.u32 %s37, 16
        %s262 = sld [smem:[#allocation3 + %s36]]
        %p263 = scmp.ge.s32.totalorder %s261, %s262
        // Predicated region
        $region41: #{tpu_custom_call.1} parent=31 // pred_check
          %p264 = pneg %p263
        $region42: #{tpu_custom_call.1} parent=31 // pred_check_branch
          %266 = sbr.rel (%p264) target = $region44
        $region43: #{tpu_custom_call.1} parent=31 // pred_region
          %267 = vst [vmem:[%s256] sm:$0xff] 0.0
          %268 = vst [vmem:[%s256 + $0x8] sm:$0xff] 0.0
        $region44: #{tpu_custom_call.1} parent=31 // pred_fallthru
          _
        %p269 = scmp.lt.s32.totalorder %s261, %s262
        // Predicated region
        $region45: #{tpu_custom_call.1} parent=31 // pred_check
          %p270 = pneg %p269
        $region46: #{tpu_custom_call.1} parent=31 // pred_check_branch
          %272 = sbr.rel (%p270) target = $region48
        $region47: #{tpu_custom_call.1} parent=31 // pred_region
          %v273 = vld [vmem:[%s226] sm:$0x1]
          %v274 = vld [vmem:[%s259] sm:$0x1]
          %v275 = vlaneseq
          %v276 = vshrl.u32 %v275, 7
          %v277 = vadd.s32 %v276, 8
          %v278 = vstv %s261
          %v279 = vadd.s32 %v278, %v276
          %v280 = vadd.s32 %v278, %v277
          %v281 = vperm.slane %v273, 0
          %v282 = vsub.s32 %v279, %v281
          %v283 = vsub.s32 %v280, %v281
          %v284 = vperm.slane %v274, 0
          %v285 = vadd.s32 %v282, 2147483648
          %v286 = vadd.s32 %v284, 2147483648
          %vm287 = vcmp.lt.s32.totalorder %v285, %v286
          %v288 = vadd.s32 %v283, 2147483648
          %v289 = vadd.s32 %v284, 2147483648
          %vm290 = vcmp.lt.s32.totalorder %v288, %v289
          %v291 = vsel %vm287, 1, 0
          %v292 = vsel %vm290, 1, 0
          %v293 = vcvt.s32.f32 %v291
          %v294 = vcvt.s32.f32 %v292
          %v295 = vld [vmem:[%s217] sm:$0xff]
          %vm296 = vcmask 64512
          %v298 = vsel %vm296, %v293, 0
          %v301 = vsel %vm296, %v294, 0
          %303 = vmatpush.msra.mxu0 0.0
          %304 = vmatpush.msra.mxu0 0.0
          %305 = vmatpush.msra.mxu0 0.0
          %306 = vmatpush.msra.mxu0 0.0
          %307 = vmatpush.msra.mxu0 0.0
          %308 = vmatpush.msra.mxu0 0.0
          %309 = vmatpush.msra.mxu0 0.0
          %310 = vmatpush.msra.mxu0 0.0
          %311 = vmatpush.msra.mxu0 0.0
          %312 = vmatpush.msra.mxu0 0.0
          %313 = vmatpush.msra.mxu0 0.0
          %314 = vmatpush.msra.mxu0 0.0
          %315 = vmatpush.msra.mxu0 0.0
          %316 = vmatpush.msra.mxu0 0.0
          %317 = vmatpush.msra.mxu0 0.0
          %318 = vmatpush.msra.mxu0 %v295
          %319 = vmatmul.f32.gmra.mxu0 %v298
          %v320 = vpop.f32.mrf.mxu0
          %v321 = vadd.f32 0.0, %v320
          %322 = vmatmul.f32.gmra.mxu0 %v301
          %v323 = vpop.f32.mrf.mxu0
          %v324 = vadd.f32 0.0, %v323
          %325 = vdwg.mxu0
          %326 = vst [vmem:[%s256] sm:$0xff] %v321
          %327 = vst [vmem:[%s256 + $0x8] sm:$0xff] %v324
        $region48: #{tpu_custom_call.1} parent=31 // pred_fallthru
          _
        %s328 = sand.u32 %s132, 1
        %s329 = scalar_lea.sflag [#allocation6], %s328
        %s330 = sand.u32 %s132, 1
        %s331 = smul.addr %s330, 16
        %s332 = scalar_lea.vmem [#allocation9], %s331
        // Predicated region
        $region49: #{tpu_custom_call.1} parent=31 // pred_check
          %p333 = pneg %p142
        $region50: #{tpu_custom_call.1} parent=31 // pred_check_branch
          %335 = sbr.rel (%p333) target = $region52
        $region51: #{tpu_custom_call.1} parent=31 // pred_region
          %s336 = smul.u32 2, %s37
          %338 = vsyncadd %s329, 0
          %s339 = smul.addr %s36, 4
          %s340 = sadd.s32 %s336, %s339
          %s341 = smul.addr %s340, 8
          %s342 = scalar_lea.hbm %s4, %s341
          %s343 = sshll.u32 %s332, 4
          %s344 = int_to_ptr.vmem [resolvable:$true] %s343
          %s345 = sshll.u32 %s342, 4
          %s346 = int_to_ptr.hbm [resolvable:$true] %s345
          %351 = dma.vmem_to_hbm [thread:$0]  %s344, 256, %s346, %s329, 128, 128, 8
        $region52: #{tpu_custom_call.1} parent=31 // pred_fallthru
          _
      $region32: #{tpu_custom_call.1} parent=5 // pred_fallthru
        _
      %p352 = scmp.le.s32.totalorder 2, %s27
      // Predicated region
      $region53: #{tpu_custom_call.1} parent=5 // pred_check
        %p353 = pneg %p352
      $region54: #{tpu_custom_call.1} parent=5 // pred_check_branch
        %355 = sbr.rel (%p353) target = $region56
      $region55: #{tpu_custom_call.1} parent=5 // pred_region
        %s356 = ssub.s32 %s27, 2
        // Predicated region
        $region57: #{tpu_custom_call.1} parent=55 // pred_check
          %p357 = pneg %p148
        $region58: #{tpu_custom_call.1} parent=55 // pred_check_branch
          %359 = sbr.rel (%p357) target = $region60
        $region59: #{tpu_custom_call.1} parent=55 // pred_region
          %s360 = sand.u32 %s133, 1
          %s361 = scalar_lea.sflag [#allocation6], %s360
          %s362 = sand.u32 %s133, 1
          %s363 = smul.addr %s362, 16
          %s364 = scalar_lea.vmem [#allocation9], %s363
          %366 = dma.done %s361, 256
        $region60: #{tpu_custom_call.1} parent=55 // pred_fallthru
          _
      $region56: #{tpu_custom_call.1} parent=5 // pred_fallthru
        _
    $region6: #{tpu_custom_call.1} parent=1 // loop_footer
      %s31 = sadd.s32 1, %s27
    $region7: #{tpu_custom_call.1} parent=1 // loop_footer_branch
      %26 = sbr.rel target = $region3
    $region8: #{tpu_custom_call.1} parent=1 // loop_exit
      _
    %367 = vsyncpa [#allocation5], 1
    %s368 = scalar_lea.sflag [#allocation5], 1
    %369 = vsyncpa %s368, 1
    %370 = vsyncpa [#allocation8], 1
    %s371 = scalar_lea.sflag [#allocation8], 1
    %372 = vsyncpa %s371, 1
    %373 = vsyncpa [#allocation6], 1
    %s374 = scalar_lea.sflag [#allocation6], 1
    %375 = vsyncpa %s374, 1

</llo_original>
